<compile_context>
chip_gen: v7x
topology: tpu7x:2x2x1
jax: 0.10.0
libtpu: 0.0.40
codegen_flags: <defaults>
</compile_context>

<pallas_src>
import jax
import jax.numpy as jnp
from jax.experimental import pallas as pl
from jax.experimental.pallas import tpu as pltpu  # noqa: F401  (TPU backend assumed)

# ----------------------------- problem sizes -----------------------------
N, CIN, H, W = 2, 4, 16, 16          # per-stream input (NCHW)
COUT = 8                             # Conv2d(CIN, COUT, 3, padding=1)
KH = KW = 3
K = KH * KW * CIN                    # 36   (im2col reduction dim)
M = N * H * W                        # 512  (flattened batch*spatial per stream)
M2 = 2 * M                           # 1024 (both streams fused along lanes)


# ------------------------------ Pallas kernel ----------------------------
def dual_conv_relu_kernel(p_ref, w_ref, b_ref, o_ref):
    """Single fused conv-as-matmul + bias + ReLU for BOTH streams.

    p_ref : (K, 2M)    im2col patches, the two streams concatenated on lanes
    w_ref : (COUT, K)  shared conv weights, flattened (kh,kw,cin)-major
    b_ref : (COUT, 1)  shared bias
    o_ref : (COUT, 2M) lane-dense output (1024 lanes -> unmasked full stores)
    """
    acc = jnp.dot(w_ref[...], p_ref[...],
                  preferred_element_type=jnp.float32)        # (COUT, 2M)
    acc = acc + b_ref[...]                                    # bias broadcast
    o_ref[...] = jnp.maximum(acc, 0.0).astype(o_ref.dtype)    # ReLU


# ------------------------------- wrapper ---------------------------------
def _im2col_slab(x_bchw):
    """(B, CIN, H, W) -> (K, B*H*W) built directly (no trailing transpose).

    k = (kh*KW + kw)*CIN + cin ;  m = b*H*W + h*W + w
    """
    xp = jnp.pad(x_bchw, ((0, 0), (0, 0), (1, 1), (1, 1)))    # padding=1
    taps = [xp[:, :, kh:kh + H, kw:kw + W]                    # (B, CIN, H, W)
            for kh in range(KH) for kw in range(KW)]
    p = jnp.stack(taps, axis=0)                               # (9, B, CIN, H, W)
    p = jnp.transpose(p, (0, 2, 1, 3, 4))                     # (9, CIN, B, H, W)
    return p.reshape(K, -1)                                   # (K, B*H*W)


def dual_stream_block_slab(x_nchw, y_nchw, weight, bias):
    """Shared conv3x3 + ReLU on both streams; returns the lane-dense
    (COUT, 2M) activation slab (the inter-block layout)."""
    # One im2col for both streams: concat along batch -> m = (s*N+n)*H*W + h*W + w
    xy = jnp.concatenate([x_nchw, y_nchw], axis=0)            # (2N, CIN, H, W)
    patches = _im2col_slab(xy)                                # (K, 2M) lane-dense
    w_flat = jnp.transpose(weight, (0, 2, 3, 1)).reshape(COUT, K)   # (COUT, K)
    b2 = bias.reshape(COUT, 1)

    cost = pl.CostEstimate(
        flops=2 * COUT * K * M2,
        transcendentals=0,
        bytes_accessed=4 * (K * M2 + COUT * K + COUT + COUT * M2),
    )

    # No grid: one block per operand (block shape == full array shape, so the
    # (8,128) rule is satisfied even though K=36).  Working set ~180 KB f32,
    # far under VMEM limits on v5e/v6e/v7x.
    return pl.pallas_call(
        dual_conv_relu_kernel,
        out_shape=jax.ShapeDtypeStruct((COUT, M2), x_nchw.dtype),
        in_specs=[
            pl.BlockSpec((K, M2)),        # patches
            pl.BlockSpec((COUT, K)),      # shared weights
            pl.BlockSpec((COUT, 1)),      # shared bias
        ],
        out_specs=pl.BlockSpec((COUT, M2)),
        cost_estimate=cost,
    )(patches, w_flat, b2)


def slab_to_nchw_pair(slab):
    """Graph-boundary conversion: (COUT, 2M) slab -> two (N, COUT, H, W)."""
    out = slab.reshape(COUT, 2, N, H, W)
    out = jnp.transpose(out, (1, 2, 0, 3, 4))                 # (2, N, COUT, H, W)
    return out[0], out[1]


def dual_stream_block(x_nchw, y_nchw, weight, bias):
    """PyTorch DualStreamBlock(conv3x3+ReLU).forward(x, y) -> (seq(x), seq(y))."""
    slab = dual_stream_block_slab(x_nchw, y_nchw, weight, bias)
    # NOTE: when chaining blocks, keep `slab` and feed it to the next block's
    # im2col; only convert at graph boundaries (done here since this is one).
    return slab_to_nchw_pair(slab)


# ------------------------------ reference --------------------------------
def reference(x_nchw, y_nchw, weight, bias):
    def one(v):
        o = jax.lax.conv_general_dilated(
            v, weight, window_strides=(1, 1), padding=((1, 1), (1, 1)),
            dimension_numbers=("NCHW", "OIHW", "NCHW"))
        o = o + bias.reshape(1, COUT, 1, 1)
        return jnp.maximum(o, 0.0)
    return one(x_nchw), one(y_nchw)


if __name__ == "__main__":
    key = jax.random.PRNGKey(0)
    kx, ky, kw, kb = jax.random.split(key, 4)

    x = jax.random.normal(kx, (N, CIN, H, W), dtype=jnp.float32)
    y = jax.random.normal(ky, (N, CIN, H, W), dtype=jnp.float32)
    # deterministic synthetic parameters (Conv2d(CIN, COUT, 3) shapes)
    weight = jax.random.normal(kw, (COUT, CIN, KH, KW), dtype=jnp.float32) * 0.1
    bias = jax.random.normal(kb, (COUT,), dtype=jnp.float32) * 0.1

    ox, oy = dual_stream_block(x, y, weight, bias)
    jax.block_until_ready((ox, oy))

    rx, ry = reference(x, y, weight, bias)
    assert jnp.allclose(ox, rx, atol=1e-4, rtol=1e-4)
    assert jnp.allclose(oy, ry, atol=1e-4, rtol=1e-4)

    print("KERNEL_OK")
</pallas_src>

<mosaic_0001>
module attributes {stable_mosaic.version = 11 : i64} {
  func.func @dual_conv_relu_kernel(%arg0: memref<36x1024xf32, #tpu.memory_space<vmem>>, %arg1: memref<8x36xf32, #tpu.memory_space<vmem>>, %arg2: memref<8x1xf32, #tpu.memory_space<vmem>>, %arg3: memref<8x1024xf32, #tpu.memory_space<vmem>>) attributes {dimension_semantics = [], scalar_prefetch = 0 : i64, scratch_operands = 0 : i64, tpu.core_type = #tpu.core_type<tc>} {
    %c0 = arith.constant 0 : index
    %c0_0 = arith.constant 0 : index
    %0 = vector.load %arg1[%c0, %c0_0] : memref<8x36xf32, #tpu.memory_space<vmem>>, vector<8x36xf32>
    %c0_1 = arith.constant 0 : index
    %c0_2 = arith.constant 0 : index
    %1 = vector.load %arg0[%c0_1, %c0_2] : memref<36x1024xf32, #tpu.memory_space<vmem>>, vector<36x1024xf32>
    %cst = arith.constant dense<0.000000e+00> : vector<8x1024xf32>
    %2 = tpu.matmul %0, %1, %cst {dimension_numbers = #tpu.dot_dimension_numbers<[1], [0], [0], [1], [0, 0, 1, 1], [], []>} : vector<8x36xf32>, vector<36x1024xf32>, vector<8x1024xf32> -> vector<8x1024xf32>
    %c0_3 = arith.constant 0 : index
    %c0_4 = arith.constant 0 : index
    %3 = vector.load %arg2[%c0_3, %c0_4] : memref<8x1xf32, #tpu.memory_space<vmem>>, vector<8x1xf32>
    %4 = vector.broadcast %3 : vector<8x1xf32> to vector<8x1024xf32>
    %5 = arith.addf %2, %4 : vector<8x1024xf32>
    %cst_5 = arith.constant 0.000000e+00 : f32
    %6 = vector.broadcast %cst_5 : f32 to vector<8x1024xf32>
    %7 = arith.maximumf %5, %6 : vector<8x1024xf32>
    %c0_6 = arith.constant 0 : index
    %c0_7 = arith.constant 0 : index
    %8 = vector.load %arg3[%c0_6, %c0_7] : memref<8x1024xf32, #tpu.memory_space<vmem>>, vector<8x1024xf32>
    tpu.vector_store %arg3[%c0_6, %c0_7], %7 {strides = array<i32>} : memref<8x1024xf32, #tpu.memory_space<vmem>>, vector<8x1024xf32>,
    return
  }
}

</mosaic_0001>

<llo_original>
// kernel: tpu_custom_call.1
$region0: #{tpu_custom_call.1}
  #allocation0 [shape = 'u32[]', space=smem, size = 0x4, offset = 0x4, fixed_abs, tag = 'smem constant byte address 0x4 - core index']
  #allocation1 [shape = 'u32[144,128]{1,0:T(1,128)}', space=vmem, size = 0x12000, scoped, tag = 'internal scratch']
  %s0 = inlined_call_operand.hbm [shape: f32[36,1024], index: 0, kind: input, shape index: {}]
  %s1 = inlined_call_operand.vmem [shape: f32[8,36], index: 1, kind: input, shape index: {}]
  %s2 = inlined_call_operand.vmem [shape: f32[8,1], index: 2, kind: input, shape index: {}]
  %s3 = inlined_call_operand.hbm [shape: f32[8,1024], index: 3, kind: output, shape index: {}]
  %s4 = sld [smem:[#allocation0]]
  $region26: #{tpu_custom_call.1} parent=0
    _
  %s6 = ssub.s32 1, %s4
  %s7 = scalar_select 0, %s6, %s4
  $region1: #{tpu_custom_call.1} parent=0
    #allocation2 [shape = 'u8[163840]{0}', space=vmem, size = 0x28000, scoped, tag = 'input window, operand 0, single buffered']
    #allocation3 [shape = 's32[1]{0}', space=sflag, size = 0x4, scoped, tag = 'scoped memory for tpu_custom_call.1']
    #allocation4 [shape = 's32[1]{0}', space=sflag, size = 0x4, scoped, tag = 'scoped memory for tpu_custom_call.1']
    #allocation5 [shape = 'u8[32768]{0}', space=vmem, size = 0x8000, scoped, tag = 'output window, operand 0, single buffered']
    %8 = vsyncpa [#allocation3], 0
    %9 = vsyncpa [#allocation4], 0
    // Predicated region
    $region2: #{tpu_custom_call.1} parent=1 // pred_check
      _
    $region3: #{tpu_custom_call.1} parent=1 // pred_check_branch
      %11 = sbr.rel (0) target = $region5
    $region4: #{tpu_custom_call.1} parent=1 // pred_region
      %s13 = ssub.s32 5120, 5120
      %14 = vsyncadd [#allocation3], %s13
      %s15 = sshll.u32 [#allocation2], 4
      %s16 = int_to_ptr.vmem [resolvable:$true] %s15
      %21 = dma.hbm_to_vmem [thread:$0]  %s0, 5120, %s16, [#allocation3], 1024, 1024, 64
    $region5: #{tpu_custom_call.1} parent=1 // pred_fallthru
      _
    // Predicated region
    $region6: #{tpu_custom_call.1} parent=1 // pred_check
      _
    $region7: #{tpu_custom_call.1} parent=1 // pred_check_branch
      %23 = sbr.rel (0) target = $region9
    $region8: #{tpu_custom_call.1} parent=1 // pred_region
      _
    $region9: #{tpu_custom_call.1} parent=1 // pred_fallthru
      _
    // Predicated region
    $region10: #{tpu_custom_call.1} parent=1 // pred_check
      _
    $region11: #{tpu_custom_call.1} parent=1 // pred_check_branch
      %25 = sbr.rel (0) target = $region13
    $region12: #{tpu_custom_call.1} parent=1 // pred_region
      _
    $region13: #{tpu_custom_call.1} parent=1 // pred_fallthru
      _
    // Predicated region
    $region14: #{tpu_custom_call.1} parent=1 // pred_check
      _
    $region15: #{tpu_custom_call.1} parent=1 // pred_check_branch
      %27 = sbr.rel (0) target = $region17
    $region16: #{tpu_custom_call.1} parent=1 // pred_region
      %28 = dma.done [#allocation3], 5120
    $region17: #{tpu_custom_call.1} parent=1 // pred_fallthru
      _
    %v29 = vld [vmem:[%s1] sm:$0xff]
    %v30 = vld [vmem:[#allocation2] sm:$0xff]
    %v31 = vld [vmem:[#allocation2 + $0x8] sm:$0xff]
    %v32 = vld [vmem:[#allocation2 + $0x10] sm:$0xff]
    %v33 = vld [vmem:[#allocation2 + $0x18] sm:$0xff]
    %v34 = vld [vmem:[#allocation2 + $0x20] sm:$0xff]
    %v35 = vld [vmem:[#allocation2 + $0x28] sm:$0xff]
    %v36 = vld [vmem:[#allocation2 + $0x30] sm:$0xff]
    %v37 = vld [vmem:[#allocation2 + $0x38] sm:$0xff]
    %v38 = vld [vmem:[#allocation2 + $0x40] sm:$0xff]
    %v39 = vld [vmem:[#allocation2 + $0x48] sm:$0xff]
    %v40 = vld [vmem:[#allocation2 + $0x50] sm:$0xff]
    %v41 = vld [vmem:[#allocation2 + $0x58] sm:$0xff]
    %v42 = vld [vmem:[#allocation2 + $0x60] sm:$0xff]
    %v43 = vld [vmem:[#allocation2 + $0x68] sm:$0xff]
    %v44 = vld [vmem:[#allocation2 + $0x70] sm:$0xff]
    %v45 = vld [vmem:[#allocation2 + $0x78] sm:$0xff]
    %v46 = vld [vmem:[#allocation2 + $0x80] sm:$0xff]
    %v47 = vld [vmem:[#allocation2 + $0x88] sm:$0xff]
    %v48 = vld [vmem:[#allocation2 + $0x90] sm:$0xff]
    %v49 = vld [vmem:[#allocation2 + $0x98] sm:$0xff]
    %v50 = vld [vmem:[#allocation2 + $0xa0] sm:$0xff]
    %v51 = vld [vmem:[#allocation2 + $0xa8] sm:$0xff]
    %v52 = vld [vmem:[#allocation2 + $0xb0] sm:$0xff]
    %v53 = vld [vmem:[#allocation2 + $0xb8] sm:$0xff]
    %v54 = vld [vmem:[#allocation2 + $0xc0] sm:$0xff]
    %v55 = vld [vmem:[#allocation2 + $0xc8] sm:$0xff]
    %v56 = vld [vmem:[#allocation2 + $0xd0] sm:$0xff]
    %v57 = vld [vmem:[#allocation2 + $0xd8] sm:$0xff]
    %v58 = vld [vmem:[#allocation2 + $0xe0] sm:$0xff]
    %v59 = vld [vmem:[#allocation2 + $0xe8] sm:$0xff]
    %v60 = vld [vmem:[#allocation2 + $0xf0] sm:$0xff]
    %v61 = vld [vmem:[#allocation2 + $0xf8] sm:$0xff]
    %v62 = vld [vmem:[#allocation2 + $0x100] sm:$0xf]
    %v63 = vld [vmem:[#allocation2 + $0x108] sm:$0xf]
    %v64 = vld [vmem:[#allocation2 + $0x110] sm:$0xf]
    %v65 = vld [vmem:[#allocation2 + $0x118] sm:$0xf]
    %v66 = vld [vmem:[#allocation2 + $0x120] sm:$0xf]
    %v67 = vld [vmem:[#allocation2 + $0x128] sm:$0xf]
    %v68 = vld [vmem:[#allocation2 + $0x130] sm:$0xf]
    %v69 = vld [vmem:[#allocation2 + $0x138] sm:$0xf]
    %v70 = vld [vmem:[%s2] sm:$0xff]
    %72 = vset.pattern.permute.xlu0 0
    %73 = vperm.xlu0 %72, %v70
    %v74 = vpop.permute.xlu0 %73
    %vm76 = vcmask 293888
    %v78 = vsel %vm76, %v29, 0
    %vm80 = vcmask 1043456
    %v82 = vsel %vm80, %v62, 0
    %v85 = vsel %vm80, %v63, 0
    %v88 = vsel %vm80, %v64, 0
    %v91 = vsel %vm80, %v65, 0
    %v94 = vsel %vm80, %v66, 0
    %v97 = vsel %vm80, %v67, 0
    %v100 = vsel %vm80, %v68, 0
    %v103 = vsel %vm80, %v69, 0
    %105 = vmatprep.subr.mxu0 %v31
    %106 = vmatpush1.msra.mxu0 %v30
    %107 = vmatprep.subr.mxu0 %v39
    %108 = vmatpush1.msra.mxu0 %v38
    %109 = vmatprep.subr.mxu0 %v47
    %110 = vmatpush1.msra.mxu0 %v46
    %111 = vmatprep.subr.mxu0 %v55
    %112 = vmatpush1.msra.mxu0 %v54
    %113 = vmatprep.subr.mxu0 %v85
    %114 = vmatpush1.msra.mxu0 %v82
    %115 = vmatprep.subr.mxu0 0.0
    %116 = vmatpush1.msra.mxu0 0.0
    %117 = vmatprep.subr.mxu0 0.0
    %118 = vmatpush1.msra.mxu0 0.0
    %119 = vmatprep.subr.mxu0 0.0
    %120 = vmatpush1.msra.mxu0 0.0
    %121 = vmatprep.subr.mxu0 0.0
    %122 = vmatpush1.msra.mxu0 0.0
    %123 = vmatprep.subr.mxu0 0.0
    %124 = vmatpush1.msra.mxu0 0.0
    %125 = vmatprep.subr.mxu0 0.0
    %126 = vmatpush1.msra.mxu0 0.0
    %127 = vmatprep.subr.mxu0 0.0
    %128 = vmatpush1.msra.mxu0 0.0
    %129 = vmatprep.subr.mxu0 0.0
    %130 = vmatpush1.msra.mxu0 0.0
    %131 = vmatprep.subr.mxu0 0.0
    %132 = vmatpush1.msra.mxu0 0.0
    %133 = vmatprep.subr.mxu0 0.0
    %134 = vmatpush1.msra.mxu0 0.0
    %135 = vmatprep.subr.mxu0 0.0
    %136 = vmatpush1.msra.mxu0 0.0
    %137 = vmatprep.subr.mxu0 0.0
    %138 = vmatpush1.msra.mxu0 0.0
    %139 = vmatprep.subr.mxu0 0.0
    %140 = vmatpush1.msra.mxu0 0.0
    %141 = vmatprep.subr.mxu0 0.0
    %142 = vmatpush1.msra.mxu0 0.0
    %143 = vmatprep.subr.mxu0 0.0
    %144 = vmatpush1.msra.mxu0 0.0
    %145 = vmatprep.subr.mxu0 0.0
    %146 = vmatpush1.msra.mxu0 0.0
    %147 = vmatprep.subr.mxu0 0.0
    %148 = vmatpush1.msra.mxu0 0.0
    %149 = vmatprep.subr.mxu0 0.0
    %150 = vmatpush1.msra.mxu0 0.0
    %151 = vmatprep.subr.mxu0 0.0
    %152 = vmatpush1.msra.mxu0 0.0
    %153 = vmatprep.subr.mxu0 0.0
    %154 = vmatpush1.msra.mxu0 0.0
    %155 = vmatprep.subr.mxu0 0.0
    %156 = vmatpush1.msra.mxu0 0.0
    %157 = vmatprep.subr.mxu0 0.0
    %158 = vmatpush1.msra.mxu0 0.0
    %159 = vmatprep.subr.mxu0 0.0
    %160 = vmatpush1.msra.mxu0 0.0
    %161 = vmatprep.subr.mxu0 0.0
    %162 = vmatpush1.msra.mxu0 0.0
    %163 = vmatprep.subr.mxu0 0.0
    %164 = vmatpush1.msra.mxu0 0.0
    %165 = vmatprep.subr.mxu0 0.0
    %166 = vmatpush1.msra.mxu0 0.0
    %167 = vmatprep.subr.mxu0 0.0
    %168 = vmatpush1.msra.mxu0 0.0
    %169 = vmatprep.mubr.f32.mxu0 0.0
    %170 = vmatmul.mubr.f32.gmra.mrb[0].mxu0 %v78
    %v171 = vpop.f32.mrb[0].mxu0
    %v172 = vadd.f32 %v74, %v171
    %v173 = vpop.f32.mrb[0].mxu0
    %v174 = vadd.f32 %v74, %v173
    %175 = vdwg.mxu0
    %176 = vmatprep.subr.mxu0 %v33
    %177 = vmatpush1.msra.mxu0 %v32
    %178 = vmatprep.subr.mxu0 %v41
    %179 = vmatpush1.msra.mxu0 %v40
    %180 = vmatprep.subr.mxu0 %v49
    %181 = vmatpush1.msra.mxu0 %v48
    %182 = vmatprep.subr.mxu0 %v57
    %183 = vmatpush1.msra.mxu0 %v56
    %184 = vmatprep.subr.mxu0 %v91
    %185 = vmatpush1.msra.mxu0 %v88
    %186 = vmatprep.subr.mxu0 0.0
    %187 = vmatpush1.msra.mxu0 0.0
    %188 = vmatprep.subr.mxu0 0.0
    %189 = vmatpush1.msra.mxu0 0.0
    %190 = vmatprep.subr.mxu0 0.0
    %191 = vmatpush1.msra.mxu0 0.0
    %192 = vmatprep.subr.mxu0 0.0
    %193 = vmatpush1.msra.mxu0 0.0
    %194 = vmatprep.subr.mxu0 0.0
    %195 = vmatpush1.msra.mxu0 0.0
    %196 = vmatprep.subr.mxu0 0.0
    %197 = vmatpush1.msra.mxu0 0.0
    %198 = vmatprep.subr.mxu0 0.0
    %199 = vmatpush1.msra.mxu0 0.0
    %200 = vmatprep.subr.mxu0 0.0
    %201 = vmatpush1.msra.mxu0 0.0
    %202 = vmatprep.subr.mxu0 0.0
    %203 = vmatpush1.msra.mxu0 0.0
    %204 = vmatprep.subr.mxu0 0.0
    %205 = vmatpush1.msra.mxu0 0.0
    %206 = vmatprep.subr.mxu0 0.0
    %207 = vmatpush1.msra.mxu0 0.0
    %208 = vmatprep.subr.mxu0 0.0
    %209 = vmatpush1.msra.mxu0 0.0
    %210 = vmatprep.subr.mxu0 0.0
    %211 = vmatpush1.msra.mxu0 0.0
    %212 = vmatprep.subr.mxu0 0.0
    %213 = vmatpush1.msra.mxu0 0.0
    %214 = vmatprep.subr.mxu0 0.0
    %215 = vmatpush1.msra.mxu0 0.0
    %216 = vmatprep.subr.mxu0 0.0
    %217 = vmatpush1.msra.mxu0 0.0
    %218 = vmatprep.subr.mxu0 0.0
    %219 = vmatpush1.msra.mxu0 0.0
    %220 = vmatprep.subr.mxu0 0.0
    %221 = vmatpush1.msra.mxu0 0.0
    %222 = vmatprep.subr.mxu0 0.0
    %223 = vmatpush1.msra.mxu0 0.0
    %224 = vmatprep.subr.mxu0 0.0
    %225 = vmatpush1.msra.mxu0 0.0
    %226 = vmatprep.subr.mxu0 0.0
    %227 = vmatpush1.msra.mxu0 0.0
    %228 = vmatprep.subr.mxu0 0.0
    %229 = vmatpush1.msra.mxu0 0.0
    %230 = vmatprep.subr.mxu0 0.0
    %231 = vmatpush1.msra.mxu0 0.0
    %232 = vmatprep.subr.mxu0 0.0
    %233 = vmatpush1.msra.mxu0 0.0
    %234 = vmatprep.subr.mxu0 0.0
    %235 = vmatpush1.msra.mxu0 0.0
    %236 = vmatprep.subr.mxu0 0.0
    %237 = vmatpush1.msra.mxu0 0.0
    %238 = vmatprep.subr.mxu0 0.0
    %239 = vmatpush1.msra.mxu0 0.0
    %240 = vmatprep.mubr.f32.mxu0 0.0
    %241 = vmatmul.mubr.f32.gmra.mrb[0].mxu0 %v78
    %v242 = vpop.f32.mrb[0].mxu0
    %v243 = vadd.f32 %v74, %v242
    %v244 = vpop.f32.mrb[0].mxu0
    %v245 = vadd.f32 %v74, %v244
    %246 = vdwg.mxu0
    %247 = vmatprep.subr.mxu0 %v35
    %248 = vmatpush1.msra.mxu0 %v34
    %249 = vmatprep.subr.mxu0 %v43
    %250 = vmatpush1.msra.mxu0 %v42
    %251 = vmatprep.subr.mxu0 %v51
    %252 = vmatpush1.msra.mxu0 %v50
    %253 = vmatprep.subr.mxu0 %v59
    %254 = vmatpush1.msra.mxu0 %v58
    %255 = vmatprep.subr.mxu0 %v97
    %256 = vmatpush1.msra.mxu0 %v94
    %257 = vmatprep.subr.mxu0 0.0
    %258 = vmatpush1.msra.mxu0 0.0
    %259 = vmatprep.subr.mxu0 0.0
    %260 = vmatpush1.msra.mxu0 0.0
    %261 = vmatprep.subr.mxu0 0.0
    %262 = vmatpush1.msra.mxu0 0.0
    %263 = vmatprep.subr.mxu0 0.0
    %264 = vmatpush1.msra.mxu0 0.0
    %265 = vmatprep.subr.mxu0 0.0
    %266 = vmatpush1.msra.mxu0 0.0
    %267 = vmatprep.subr.mxu0 0.0
    %268 = vmatpush1.msra.mxu0 0.0
    %269 = vmatprep.subr.mxu0 0.0
    %270 = vmatpush1.msra.mxu0 0.0
    %271 = vmatprep.subr.mxu0 0.0
    %272 = vmatpush1.msra.mxu0 0.0
    %273 = vmatprep.subr.mxu0 0.0
    %274 = vmatpush1.msra.mxu0 0.0
    %275 = vmatprep.subr.mxu0 0.0
    %276 = vmatpush1.msra.mxu0 0.0
    %277 = vmatprep.subr.mxu0 0.0
    %278 = vmatpush1.msra.mxu0 0.0
    %279 = vmatprep.subr.mxu0 0.0
    %280 = vmatpush1.msra.mxu0 0.0
    %281 = vmatprep.subr.mxu0 0.0
    %282 = vmatpush1.msra.mxu0 0.0
    %283 = vmatprep.subr.mxu0 0.0
    %284 = vmatpush1.msra.mxu0 0.0
    %285 = vmatprep.subr.mxu0 0.0
    %286 = vmatpush1.msra.mxu0 0.0
    %287 = vmatprep.subr.mxu0 0.0
    %288 = vmatpush1.msra.mxu0 0.0
    %289 = vmatprep.subr.mxu0 0.0
    %290 = vmatpush1.msra.mxu0 0.0
    %291 = vmatprep.subr.mxu0 0.0
    %292 = vmatpush1.msra.mxu0 0.0
    %293 = vmatprep.subr.mxu0 0.0
    %294 = vmatpush1.msra.mxu0 0.0
    %295 = vmatprep.subr.mxu0 0.0
    %296 = vmatpush1.msra.mxu0 0.0
    %297 = vmatprep.subr.mxu0 0.0
    %298 = vmatpush1.msra.mxu0 0.0
    %299 = vmatprep.subr.mxu0 0.0
    %300 = vmatpush1.msra.mxu0 0.0
    %301 = vmatprep.subr.mxu0 0.0
    %302 = vmatpush1.msra.mxu0 0.0
    %303 = vmatprep.subr.mxu0 0.0
    %304 = vmatpush1.msra.mxu0 0.0
    %305 = vmatprep.subr.mxu0 0.0
    %306 = vmatpush1.msra.mxu0 0.0
    %307 = vmatprep.subr.mxu0 0.0
    %308 = vmatpush1.msra.mxu0 0.0
    %309 = vmatprep.subr.mxu0 0.0
    %310 = vmatpush1.msra.mxu0 0.0
    %311 = vmatprep.mubr.f32.mxu0 0.0
    %312 = vmatmul.mubr.f32.gmra.mrb[0].mxu0 %v78
    %v313 = vpop.f32.mrb[0].mxu0
    %v314 = vadd.f32 %v74, %v313
    %v315 = vpop.f32.mrb[0].mxu0
    %v316 = vadd.f32 %v74, %v315
    %317 = vdwg.mxu0
    %318 = vmatprep.subr.mxu0 %v37
    %319 = vmatpush1.msra.mxu0 %v36
    %320 = vmatprep.subr.mxu0 %v45
    %321 = vmatpush1.msra.mxu0 %v44
    %322 = vmatprep.subr.mxu0 %v53
    %323 = vmatpush1.msra.mxu0 %v52
    %324 = vmatprep.subr.mxu0 %v61
    %325 = vmatpush1.msra.mxu0 %v60
    %326 = vmatprep.subr.mxu0 %v103
    %327 = vmatpush1.msra.mxu0 %v100
    %328 = vmatprep.subr.mxu0 0.0
    %329 = vmatpush1.msra.mxu0 0.0
    %330 = vmatprep.subr.mxu0 0.0
    %331 = vmatpush1.msra.mxu0 0.0
    %332 = vmatprep.subr.mxu0 0.0
    %333 = vmatpush1.msra.mxu0 0.0
    %334 = vmatprep.subr.mxu0 0.0
    %335 = vmatpush1.msra.mxu0 0.0
    %336 = vmatprep.subr.mxu0 0.0
    %337 = vmatpush1.msra.mxu0 0.0
    %338 = vmatprep.subr.mxu0 0.0
    %339 = vmatpush1.msra.mxu0 0.0
    %340 = vmatprep.subr.mxu0 0.0
    %341 = vmatpush1.msra.mxu0 0.0
    %342 = vmatprep.subr.mxu0 0.0
    %343 = vmatpush1.msra.mxu0 0.0
    %344 = vmatprep.subr.mxu0 0.0
    %345 = vmatpush1.msra.mxu0 0.0
    %346 = vmatprep.subr.mxu0 0.0
    %347 = vmatpush1.msra.mxu0 0.0
    %348 = vmatprep.subr.mxu0 0.0
    %349 = vmatpush1.msra.mxu0 0.0
    %350 = vmatprep.subr.mxu0 0.0
    %351 = vmatpush1.msra.mxu0 0.0
    %352 = vmatprep.subr.mxu0 0.0
    %353 = vmatpush1.msra.mxu0 0.0
    %354 = vmatprep.subr.mxu0 0.0
    %355 = vmatpush1.msra.mxu0 0.0
    %356 = vmatprep.subr.mxu0 0.0
    %357 = vmatpush1.msra.mxu0 0.0
    %358 = vmatprep.subr.mxu0 0.0
    %359 = vmatpush1.msra.mxu0 0.0
    %360 = vmatprep.subr.mxu0 0.0
    %361 = vmatpush1.msra.mxu0 0.0
    %362 = vmatprep.subr.mxu0 0.0
    %363 = vmatpush1.msra.mxu0 0.0
    %364 = vmatprep.subr.mxu0 0.0
    %365 = vmatpush1.msra.mxu0 0.0
    %366 = vmatprep.subr.mxu0 0.0
    %367 = vmatpush1.msra.mxu0 0.0
    %368 = vmatprep.subr.mxu0 0.0
    %369 = vmatpush1.msra.mxu0 0.0
    %370 = vmatprep.subr.mxu0 0.0
    %371 = vmatpush1.msra.mxu0 0.0
    %372 = vmatprep.subr.mxu0 0.0
    %373 = vmatpush1.msra.mxu0 0.0
    %374 = vmatprep.subr.mxu0 0.0
    %375 = vmatpush1.msra.mxu0 0.0
    %376 = vmatprep.subr.mxu0 0.0
    %377 = vmatpush1.msra.mxu0 0.0
    %378 = vmatprep.subr.mxu0 0.0
    %379 = vmatpush1.msra.mxu0 0.0
    %380 = vmatprep.subr.mxu0 0.0
    %381 = vmatpush1.msra.mxu0 0.0
    %382 = vmatprep.mubr.f32.mxu0 0.0
    %383 = vmatmul.mubr.f32.gmra.mrb[0].mxu0 %v78
    %v384 = vpop.f32.mrb[0].mxu0
    %v385 = vadd.f32 %v74, %v384
    %v386 = vpop.f32.mrb[0].mxu0
    %v387 = vadd.f32 %v74, %v386
    %388 = vdwg.mxu0
    %v389 = vmax.f32 %v172, 0.0
    %v390 = vmax.f32 %v174, 0.0
    %v391 = vmax.f32 %v243, 0.0
    %v392 = vmax.f32 %v245, 0.0
    %v393 = vmax.f32 %v314, 0.0
    %v394 = vmax.f32 %v316, 0.0
    %v395 = vmax.f32 %v385, 0.0
    %v396 = vmax.f32 %v387, 0.0
    %397 = vst [vmem:[#allocation5] sm:$0xff] %v389
    %398 = vst [vmem:[#allocation5 + $0x8] sm:$0xff] %v390
    %399 = vst [vmem:[#allocation5 + $0x10] sm:$0xff] %v391
    %400 = vst [vmem:[#allocation5 + $0x18] sm:$0xff] %v392
    %401 = vst [vmem:[#allocation5 + $0x20] sm:$0xff] %v393
    %402 = vst [vmem:[#allocation5 + $0x28] sm:$0xff] %v394
    %403 = vst [vmem:[#allocation5 + $0x30] sm:$0xff] %v395
    %404 = vst [vmem:[#allocation5 + $0x38] sm:$0xff] %v396
    // Predicated region
    $region18: #{tpu_custom_call.1} parent=1 // pred_check
      _
    $region19: #{tpu_custom_call.1} parent=1 // pred_check_branch
      %406 = sbr.rel (0) target = $region21
    $region20: #{tpu_custom_call.1} parent=1 // pred_region
      %s408 = ssub.s32 1024, 1024
      %409 = vsyncadd [#allocation4], %s408
      %s411 = sshll.u32 [#allocation5], 4
      %s412 = int_to_ptr.vmem [resolvable:$true] %s411
      %414 = dma.vmem_to_hbm [thread:$0]  %s412, 1024, %s3, [#allocation4]
    $region21: #{tpu_custom_call.1} parent=1 // pred_fallthru
      _
    // Predicated region
    $region22: #{tpu_custom_call.1} parent=1 // pred_check
      _
    $region23: #{tpu_custom_call.1} parent=1 // pred_check_branch
      %416 = sbr.rel (0) target = $region25
    $region24: #{tpu_custom_call.1} parent=1 // pred_region
      %417 = dma.done [#allocation4], 1024
    $region25: #{tpu_custom_call.1} parent=1 // pred_fallthru
      _
    %418 = vsyncpa [#allocation3], 1
    %419 = vsyncpa [#allocation4], 1

</llo_original>
